<compile_context>
chip_gen: v7x
topology: tpu7x:2x2x1
jax: 0.10.0
libtpu: 0.0.40
codegen_flags: <defaults>
</compile_context>

<pallas_src>
import functools

import jax
import jax.numpy as jnp
from jax import lax
from jax.experimental import pallas as pl
from jax.experimental.pallas import tpu as pltpu


def _dice_kernel(pred_ref, gt_ref, out_ref, *, ts, S, n_half, needs_mask):
    """pred_ref / gt_ref: (R, ts) tiles of the flattened (R = B*2, S = H*W) inputs.

    out_ref: (R, 2) resident accumulator for spatial shard h = program_id(0).
    Row r is batch r//2, channel r%2:
      out[r] = [sum(p_r * g_r), sum(p_r) + sum(g_r)]  over this shard's columns.
    """
    h = pl.program_id(0)
    s = pl.program_id(1)

    @pl.when(s == 0)
    def _():
        out_ref[...] = jnp.zeros_like(out_ref)

    p = pred_ref[...].astype(jnp.float32)
    g = gt_ref[...].astype(jnp.float32)

    def accumulate(prod, both):
        # sum(p) + sum(g) == sum(p + g): one cross-lane reduction instead of two.
        out_ref[:, 0:1] += jnp.sum(prod, axis=-1, keepdims=True)   # intersection
        out_ref[:, 1:2] += jnp.sum(both, axis=-1, keepdims=True)   # sum

    if not needs_mask:
        accumulate(p * g, p + g)
    else:
        t = h * n_half + s          # global spatial tile index (unclamped)
        first_masked = S // ts      # first tile containing any column >= S

        @pl.when(t < first_masked)
        def _():
            accumulate(p * g, p + g)

        @pl.when(t >= first_masked)   # ragged tail tile and/or phantom tiles
        def _():
            col = t * ts + lax.broadcasted_iota(jnp.int32, p.shape, 1)
            valid = col < S
            accumulate(jnp.where(valid, p * g, 0.0),
                       jnp.where(valid, p + g, 0.0))


def compute_dice_onehot_binary(pred, gt, *, block_bytes=4 << 20):
    """pred, gt: (B, 2, H, W). Returns (DiceB, DiceF), each (B, 2) float32."""
    B, C, H, W = pred.shape
    assert C == 2, "module assumes binary one-hot (2 channels)"
    assert gt.shape == pred.shape

    R = B * C
    S = H * W

    # Free reshape for row-major NCHW: rows = (batch, channel), lanes = H*W.
    pred2 = pred.reshape(R, S)
    gt2 = gt.reshape(R, S)

    isz = jnp.dtype(pred.dtype).itemsize + jnp.dtype(gt.dtype).itemsize  # both inputs

    # Spatial (lane) tile: use the full dim when it fits the per-step byte budget
    # (~block_bytes per input, 2*block_bytes across both); otherwise a multiple
    # of 128 with an in-kernel mask on the ragged tail. No wrapper-side padding.
    lanes_budget = max(128, (2 * block_bytes) // (R * isz))
    ts = S if S <= lanes_budget else (lanes_budget // 128) * 128
    n_s = pl.cdiv(S, ts)

    # Split the spatial reduction into 2 shards so the 'parallel' grid axis has
    # >= 2 tiles (both TensorCores on v7x); no-op / serial on v5e & v6e.
    n_shards = 2 if n_s >= 2 else 1
    n_half = pl.cdiv(n_s, n_shards)
    needs_mask = n_shards * n_half * ts > S      # ragged tail or phantom tiles

    if n_shards * n_half > n_s:
        # Phantom tiles exist (odd tile count): clamp the DMA block index; their
        # contribution is fully masked to zero in-kernel.
        spatial_idx = lambda h, s: jnp.minimum(h * n_half + s, n_s - 1)
    else:
        spatial_idx = lambda h, s: h * n_half + s

    in_spec = pl.BlockSpec((R, ts), lambda h, s: (0, spatial_idx(h, s)))
    # Per-shard resident accumulator block (leading dim squeezed in kernel).
    out_spec = pl.BlockSpec((None, R, 2), lambda h, s: (h, 0, 0))

    kernel = functools.partial(
        _dice_kernel, ts=ts, S=S, n_half=n_half, needs_mask=needs_mask)

    # Raise the scoped-VMEM limit only when the 2-deep-pipelined input blocks
    # would not fit v5e's 16 MiB default (safe on all gens: well under physical).
    in_block_bytes = R * ts * isz                      # both inputs, one buffer
    vmem_need = 2 * in_block_bytes + (8 << 20)         # double-buffer + headroom
    vmem_limit = int(vmem_need) if vmem_need > (16 << 20) else None

    cost = pl.CostEstimate(
        flops=3 * R * S,                                # mul, add(prod-sum), add(sum)
        transcendentals=0,
        bytes_accessed=R * S * isz + n_shards * R * 2 * 4,
    )

    out = pl.pallas_call(
        kernel,
        out_shape=jax.ShapeDtypeStruct((n_shards, R, 2), jnp.float32),
        grid=(n_shards, n_half),
        in_specs=[in_spec, in_spec],
        out_specs=out_spec,
        compiler_params=pltpu.CompilerParams(
            dimension_semantics=("parallel", "arbitrary"),
            vmem_limit_bytes=vmem_limit,
        ),
        cost_estimate=cost,
    )(pred2, gt2)

    out = out.sum(axis=0).reshape(B, C, 2)   # tiny (<= 2 x R x 2) post-processing
    diceB = out[:, 0, :]
    diceF = out[:, 1, :]
    return diceB, diceF


def _reference(pred, gt):
    pred = pred.astype(jnp.float32)
    gt = gt.astype(jnp.float32)
    inter = jnp.sum(pred * gt, axis=(2, 3))                     # (B, 2)
    sums = jnp.sum(pred, axis=(2, 3)) + jnp.sum(gt, axis=(2, 3))
    diceB = jnp.stack([inter[:, 0], sums[:, 0]], axis=1)
    diceF = jnp.stack([inter[:, 1], sums[:, 1]], axis=1)
    return diceB, diceF


def _make_inputs(key, B, C, H, W):
    k1, k2 = jax.random.split(key)
    logits = jax.random.normal(k1, (B, C, H, W), dtype=jnp.float32)
    pred = jax.nn.softmax(logits, axis=1)
    labels = jax.random.bernoulli(k2, 0.5, (B, H, W)).astype(jnp.int32)
    gt = jax.nn.one_hot(labels, C, axis=1, dtype=jnp.float32)   # (B, 2, H, W)
    return pred, gt


if __name__ == "__main__":
    key = jax.random.PRNGKey(0)
    kA, kB, kC = jax.random.split(key, 3)

    # Case 1: single full-dim spatial tile (S = 256), no masking.
    pred, gt = _make_inputs(kA, B=2, C=2, H=16, W=16)
    diceB, diceF = compute_dice_onehot_binary(pred, gt)
    jax.block_until_ready((diceB, diceF))
    refB, refF = _reference(pred, gt)
    assert jnp.allclose(diceB, refB, rtol=1e-5, atol=1e-5)
    assert jnp.allclose(diceF, refF, rtol=1e-5, atol=1e-5)

    # Case 2: full-dim tile with non-multiple-of-8/128 dims (R=6, S=240).
    pred2, gt2 = _make_inputs(kB, B=3, C=2, H=12, W=20)
    diceB2, diceF2 = compute_dice_onehot_binary(pred2, gt2)
    jax.block_until_ready((diceB2, diceF2))
    refB2, refF2 = _reference(pred2, gt2)
    assert jnp.allclose(diceB2, refB2, rtol=1e-5, atol=1e-5)
    assert jnp.allclose(diceF2, refF2, rtol=1e-5, atol=1e-5)

    # Case 3: small block_bytes forces multi-tile spatial loop + 2-shard split
    # + ragged-tail mask + phantom-tile clamp (S=1600, ts=256 -> 7 real tiles).
    pred3, gt3 = _make_inputs(kC, B=2, C=2, H=40, W=40)
    diceB3, diceF3 = compute_dice_onehot_binary(pred3, gt3, block_bytes=4096)
    jax.block_until_ready((diceB3, diceF3))
    refB3, refF3 = _reference(pred3, gt3)
    assert jnp.allclose(diceB3, refB3, rtol=1e-5, atol=1e-5)
    assert jnp.allclose(diceF3, refF3, rtol=1e-5, atol=1e-5)

    print("KERNEL_OK")
</pallas_src>

<mosaic_0001>
module attributes {stable_mosaic.version = 11 : i64} {
  func.func @_dice_kernel(%arg0: i32, %arg1: i32, %arg2: memref<4x256xf32, #tpu.memory_space<vmem>>, %arg3: memref<4x256xf32, #tpu.memory_space<vmem>>, %arg4: memref<1x4x2xf32, #tpu.memory_space<vmem>>) attributes {dimension_semantics = [#tpu.dimension_semantics<parallel>, #tpu.dimension_semantics<arbitrary>], iteration_bounds = array<i64: 1, 1>, scalar_prefetch = 0 : i64, scratch_operands = 0 : i64, tpu.core_type = #tpu.core_type<tc>, window_params = [{transform_indices = @transform_0, window_bounds = array<i64: 4, 256>}, {transform_indices = @transform_1, window_bounds = array<i64: 4, 256>}, {transform_indices = @transform_2, window_bounds = array<i64: 1, 4, 2>}]} {
    %c0_i32 = arith.constant 0 : i32
    %0 = arith.cmpi eq, %arg1, %c0_i32 : i32
    %1 = arith.extui %0 : i1 to i32
    %c0_i32_0 = arith.constant 0 : i32
    %2 = arith.cmpi ne, %1, %c0_i32_0 : i32
    scf.if %2 {
      %cst_16 = arith.constant 0.000000e+00 : f32
      %23 = vector.broadcast %cst_16 : f32 to vector<4x2xf32>
      %c0_17 = arith.constant 0 : index
      %c0_18 = arith.constant 0 : index
      %c0_19 = arith.constant 0 : index
      %24 = vector.load %arg4[%c0_17, %c0_18, %c0_19] : memref<1x4x2xf32, #tpu.memory_space<vmem>>, vector<1x4x2xf32>
      %25 = vector.shape_cast %24 : vector<1x4x2xf32> to vector<4x2xf32>
      %26 = vector.shape_cast %23 : vector<4x2xf32> to vector<1x4x2xf32>
      tpu.vector_store %arg4[%c0_17, %c0_18, %c0_19], %26 {strides = array<i32>} : memref<1x4x2xf32, #tpu.memory_space<vmem>>, vector<1x4x2xf32>,
    } else {
    }
    %c0 = arith.constant 0 : index
    %c0_1 = arith.constant 0 : index
    %3 = vector.load %arg2[%c0, %c0_1] : memref<4x256xf32, #tpu.memory_space<vmem>>, vector<4x256xf32>
    %c0_2 = arith.constant 0 : index
    %c0_3 = arith.constant 0 : index
    %4 = vector.load %arg3[%c0_2, %c0_3] : memref<4x256xf32, #tpu.memory_space<vmem>>, vector<4x256xf32>
    %5 = arith.mulf %3, %4 : vector<4x256xf32>
    %6 = arith.addf %3, %4 : vector<4x256xf32>
    %c0_4 = arith.constant 0 : index
    %c0_5 = arith.constant 0 : index
    %c0_6 = arith.constant 0 : index
    %7 = vector.load %arg4[%c0_4, %c0_5, %c0_6] : memref<1x4x2xf32, #tpu.memory_space<vmem>>, vector<1x4x1xf32>
    %8 = vector.shape_cast %7 : vector<1x4x1xf32> to vector<4x1xf32>
    %cst = arith.constant dense<0.000000e+00> : vector<4xf32>
    %9 = vector.multi_reduction <add>, %5, %cst [1] : vector<4x256xf32> to vector<4xf32>
    %10 = vector.shape_cast %9 : vector<4xf32> to vector<4x1xf32>
    %11 = arith.addf %8, %10 : vector<4x1xf32>
    %c0_7 = arith.constant 0 : index
    %c0_8 = arith.constant 0 : index
    %c0_9 = arith.constant 0 : index
    %12 = vector.load %arg4[%c0_7, %c0_8, %c0_9] : memref<1x4x2xf32, #tpu.memory_space<vmem>>, vector<1x4x1xf32>
    %13 = vector.shape_cast %12 : vector<1x4x1xf32> to vector<4x1xf32>
    %14 = vector.shape_cast %11 : vector<4x1xf32> to vector<1x4x1xf32>
    tpu.vector_store %arg4[%c0_7, %c0_8, %c0_9], %14 {strides = array<i32>} : memref<1x4x2xf32, #tpu.memory_space<vmem>>, vector<1x4x1xf32>,
    %c0_10 = arith.constant 0 : index
    %c0_11 = arith.constant 0 : index
    %c1 = arith.constant 1 : index
    %15 = vector.load %arg4[%c0_10, %c0_11, %c1] : memref<1x4x2xf32, #tpu.memory_space<vmem>>, vector<1x4x1xf32>
    %16 = vector.shape_cast %15 : vector<1x4x1xf32> to vector<4x1xf32>
    %cst_12 = arith.constant dense<0.000000e+00> : vector<4xf32>
    %17 = vector.multi_reduction <add>, %6, %cst_12 [1] : vector<4x256xf32> to vector<4xf32>
    %18 = vector.shape_cast %17 : vector<4xf32> to vector<4x1xf32>
    %19 = arith.addf %16, %18 : vector<4x1xf32>
    %c0_13 = arith.constant 0 : index
    %c0_14 = arith.constant 0 : index
    %c1_15 = arith.constant 1 : index
    %20 = vector.load %arg4[%c0_13, %c0_14, %c1_15] : memref<1x4x2xf32, #tpu.memory_space<vmem>>, vector<1x4x1xf32>
    %21 = vector.shape_cast %20 : vector<1x4x1xf32> to vector<4x1xf32>
    %22 = vector.shape_cast %19 : vector<4x1xf32> to vector<1x4x1xf32>
    tpu.vector_store %arg4[%c0_13, %c0_14, %c1_15], %22 {strides = array<i32>} : memref<1x4x2xf32, #tpu.memory_space<vmem>>, vector<1x4x1xf32>,
    return
  }
  func.func @transform_0(%arg0: i32, %arg1: i32) -> (i32, i32) {
    %c1_i32 = arith.constant 1 : i32
    %0 = arith.muli %arg0, %c1_i32 : i32
    %1 = arith.addi %0, %arg1 : i32
    %c0_i32 = arith.constant 0 : i32
    %c0_i32_0 = arith.constant 0 : i32
    return %c0_i32, %1 : i32, i32
  }
  func.func @transform_1(%arg0: i32, %arg1: i32) -> (i32, i32) {
    %c1_i32 = arith.constant 1 : i32
    %0 = arith.muli %arg0, %c1_i32 : i32
    %1 = arith.addi %0, %arg1 : i32
    %c0_i32 = arith.constant 0 : i32
    %c0_i32_0 = arith.constant 0 : i32
    return %c0_i32, %1 : i32, i32
  }
  func.func @transform_2(%arg0: i32, %arg1: i32) -> (i32, i32, i32) {
    %c0_i32 = arith.constant 0 : i32
    %c0_i32_0 = arith.constant 0 : i32
    %c0_i32_1 = arith.constant 0 : i32
    return %arg0, %c0_i32, %c0_i32_0 : i32, i32, i32
  }
}

</mosaic_0001>

<llo_original>
// kernel: tpu_custom_call.1
$region0: #{tpu_custom_call.1}
  #allocation0 [shape = 'u32[]', space=smem, size = 0x4, offset = 0x4, fixed_abs, tag = 'smem constant byte address 0x4 - core index']
  #allocation1 [shape = 'u32[144,128]{1,0:T(1,128)}', space=vmem, size = 0x12000, scoped, tag = 'internal scratch']
  %s0 = inlined_call_operand.hbm [shape: f32[4,256], index: 0, kind: input, shape index: {}]
  %s1 = inlined_call_operand.hbm [shape: f32[4,256], index: 1, kind: input, shape index: {}]
  %s2 = inlined_call_operand.vmem [shape: f32[1,4,2], index: 2, kind: output, shape index: {}]
  %s3 = sld [smem:[#allocation0]]
  $region30: #{tpu_custom_call.1} parent=0
    _
  %s5 = ssub.s32 1, %s3
  %s6 = scalar_select 0, %s5, %s3
  $region1: #{tpu_custom_call.1} parent=0
    #allocation2 [shape = 'u8[4096]{0}', space=vmem, size = 0x1000, scoped, tag = 'input window, operand 0, single buffered']
    #allocation3 [shape = 's32[1]{0}', space=sflag, size = 0x4, scoped, tag = 'scoped memory for tpu_custom_call.1']
    #allocation4 [shape = 'u8[4096]{0}', space=vmem, size = 0x1000, scoped, tag = 'input window, operand 1, single buffered']
    #allocation5 [shape = 's32[1]{0}', space=sflag, size = 0x4, scoped, tag = 'scoped memory for tpu_custom_call.1']
    %7 = vsyncpa [#allocation3], 0
    %8 = vsyncpa [#allocation5], 0
    // Predicated region
    $region2: #{tpu_custom_call.1} parent=1 // pred_check
      _
    $region3: #{tpu_custom_call.1} parent=1 // pred_check_branch
      %10 = sbr.rel (0) target = $region5
    $region4: #{tpu_custom_call.1} parent=1 // pred_region
      %s11 = sadd.s32 0, 0
      %s12 = smul.u32 2, %s11
      %s14 = ssub.s32 128, 128
      %15 = vsyncadd [#allocation3], %s14
      %s16 = smul.addr %s12, 64
      %s17 = scalar_lea.hbm %s0, %s16
      %s19 = sshll.u32 [#allocation2], 4
      %s20 = int_to_ptr.vmem [resolvable:$true] %s19
      %22 = dma.hbm_to_vmem [thread:$0]  %s17, 128, %s20, [#allocation3]
    $region5: #{tpu_custom_call.1} parent=1 // pred_fallthru
      _
    // Predicated region
    $region6: #{tpu_custom_call.1} parent=1 // pred_check
      _
    $region7: #{tpu_custom_call.1} parent=1 // pred_check_branch
      %24 = sbr.rel (0) target = $region9
    $region8: #{tpu_custom_call.1} parent=1 // pred_region
      %s25 = sadd.s32 0, 0
      %s26 = smul.u32 2, %s25
      %s28 = ssub.s32 128, 128
      %29 = vsyncadd [#allocation5], %s28
      %s30 = smul.addr %s26, 64
      %s31 = scalar_lea.hbm %s1, %s30
      %s33 = sshll.u32 [#allocation4], 4
      %s34 = int_to_ptr.vmem [resolvable:$true] %s33
      %36 = dma.hbm_to_vmem [thread:$0]  %s31, 128, %s34, [#allocation5]
    $region9: #{tpu_custom_call.1} parent=1 // pred_fallthru
      _
    // Predicated region
    $region10: #{tpu_custom_call.1} parent=1 // pred_check
      _
    $region11: #{tpu_custom_call.1} parent=1 // pred_check_branch
      %38 = sbr.rel (0) target = $region13
    $region12: #{tpu_custom_call.1} parent=1 // pred_region
      %39 = dma.done [#allocation3], 128
    $region13: #{tpu_custom_call.1} parent=1 // pred_fallthru
      _
    // Predicated region
    $region14: #{tpu_custom_call.1} parent=1 // pred_check
      _
    $region15: #{tpu_custom_call.1} parent=1 // pred_check_branch
      %41 = sbr.rel (0) target = $region17
    $region16: #{tpu_custom_call.1} parent=1 // pred_region
      %42 = dma.done [#allocation5], 128
    $region17: #{tpu_custom_call.1} parent=1 // pred_fallthru
      _
    %s43 = sadd.s32 0, 0
    %s44 = smul.u32 2, %s43
    %s45 = sadd.s32 0, 0
    %s46 = smul.u32 2, %s45
    %p47 = scmp.eq.s32.totalorder 0, 0
    // Predicated region
    $region18: #{tpu_custom_call.1} parent=1 // pred_check
      %p48 = pneg %p47
    $region19: #{tpu_custom_call.1} parent=1 // pred_check_branch
      %50 = sbr.rel (%p48) target = $region21
    $region20: #{tpu_custom_call.1} parent=1 // pred_region
      %vm51 = vcmask 11264
      %52 = vst.msk [vmem:[%s2] sm:$0xf] %vm51, 0.0
    $region21: #{tpu_custom_call.1} parent=1 // pred_fallthru
      _
    %v53 = vld [vmem:[#allocation2] sm:$0xff]
    %v54 = vld [vmem:[#allocation4] sm:$0xff]
    %v55 = vmul.f32 %v53, %v54
    %v56 = vadd.f32 %v53, %v54
    %v57 = vld [vmem:[%s2] sm:$0xf]
    %v59 = vcombine.high %v55, %v55
    %vm61 = vcmask 1043456
    %v62 = vsel %vm61, %v55, 0.0
    %v63 = vsel %vm61, %v59, 0.0
    %v64 = vadd.f32 %v62, %v63
    %65 = vadd.xlane.f32.xlu0 %v64
    %v66 = vpop.xlane.xlu0 %65
    %v67 = vadd.f32 %v57, %v66
    %vm68 = vcmask 3072
    %69 = vst.msk [vmem:[%s2] sm:$0xf] %vm68, %v67
    %v70 = vld [vmem:[%s2] sm:$0xf]
    %v72 = vcombine.high %v56, %v56
    %v74 = vsel %vm61, %v56, 0.0
    %v75 = vsel %vm61, %v72, 0.0
    %v76 = vadd.f32 %v74, %v75
    %77 = vadd.xlane.f32.xlu0 %v76
    %v78 = vpop.xlane.xlu0 %77
    %v79 = vadd.f32 %v70, %v78
    %vm80 = vcmask 11272
    %81 = vst.msk [vmem:[%s2] sm:$0xf] %vm80, %v79
    // Predicated region
    $region22: #{tpu_custom_call.1} parent=1 // pred_check
      _
    $region23: #{tpu_custom_call.1} parent=1 // pred_check_branch
      %83 = sbr.rel (0) target = $region25
    $region24: #{tpu_custom_call.1} parent=1 // pred_region
      _
    $region25: #{tpu_custom_call.1} parent=1 // pred_fallthru
      _
    // Predicated region
    $region26: #{tpu_custom_call.1} parent=1 // pred_check
      _
    $region27: #{tpu_custom_call.1} parent=1 // pred_check_branch
      %85 = sbr.rel (0) target = $region29
    $region28: #{tpu_custom_call.1} parent=1 // pred_region
      _
    $region29: #{tpu_custom_call.1} parent=1 // pred_fallthru
      _
    %86 = vsyncpa [#allocation3], 1
    %87 = vsyncpa [#allocation5], 1

</llo_original>
